<compile_context>
chip_gen: v7x
topology: tpu7x:2x2x1
jax: 0.10.0
libtpu: 0.0.40
codegen_flags: <defaults>
</compile_context>

<pallas_src>
import functools

import jax
import jax.numpy as jnp
from jax.experimental import pallas as pl
from jax.experimental.pallas import tpu as pltpu

NUM_HASH_FUNCTIONS = 4
HIDDEN_DIM = 128


def _round_up(x, m):
    return (x + m - 1) // m * m


def _dhe_kernel(x_ref, w1_ref, b1_ref, w2_ref, b2_ref, o_ref, y_scr):
    # x_ref: (TB, K) in the caller's dtype; the hash_vector.float() cast is done here
    # (VPU convert, hidden under the DMA) instead of as an extra HBM pass in the wrapper.
    x = x_ref[...].astype(jnp.float32)
    w1 = w1_ref[...]                           # (K, 128) f32
    out_dim = w2_ref.shape[1]
    pack = o_ref.shape[1] // out_dim           # batch rows packed per 128-lane out row

    # fc1 on the VPU: h = b1 + sum_k x[:, k] * w1[k, :] as K unrolled broadcast FMAs.
    h = x[:, 0:1] * w1[0:1, :] + b1_ref[...]
    for k in range(1, w1.shape[0]):            # static K -> unrolled at trace time
        h = h + x[:, k:k + 1] * w1[k:k + 1, :]
    h = jnp.maximum(h, 0.0)

    # fc2 on the MXU, full f32 (matches the PyTorch Linear; MXU has huge slack here).
    y = jnp.dot(h, w2_ref[...], preferred_element_type=jnp.float32) + b2_ref[...]

    if pack == 1:
        # out_dim does not evenly divide 128: plain (TB, out_dim) store.
        o_ref[...] = y.astype(o_ref.dtype)
    else:
        # Lane-dense packing: o[i, r*out_dim + c] = y[i*pack + r, c].  The packed HBM
        # array is byte-identical to the row-major (B, out_dim) embedding, so the
        # wrapper reshape back is free.  Stage y in VMEM scratch and repack it with
        # sublane-strided reads.
        y_scr[...] = y
        rows = o_ref.shape[0]
        for r in range(pack):                  # static -> unrolled
            o_ref[:, r * out_dim:(r + 1) * out_dim] = (
                y_scr[pl.ds(r, rows, stride=pack), :].astype(o_ref.dtype))


@functools.partial(jax.jit, static_argnames=("block_batch", "out_dtype"))
def user_embedding_forward(hash_vector, w1, b1, w2, b2, *,
                           block_batch=8192, out_dtype=jnp.float32):
    """hash_vector: (B, num_hash_functions), any numeric dtype -> (B, out_dim)."""
    B, K = hash_vector.shape
    out_dim = w2.shape[1]

    # Lane-dense output packing factor (8 for embedding_dim=16).
    pack = 128 // out_dim if (0 < out_dim <= 128 and 128 % out_dim == 0) else 1
    brow = pl.cdiv(B, pack)                              # packed output rows
    # Rows-per-tile: multiple of 8 (sublane rule) unless one tile covers everything.
    rpt = max(8, _round_up(block_batch, 8 * pack) // pack)
    rpt = min(rpt, brow)
    tb = rpt * pack                                      # batch rows per tile
    num_tiles = pl.cdiv(brow, rpt)

    # VMEM budget: lane-padded, double-buffered in/out blocks + scratch + headroom for
    # the f32 intermediates.  Needed on v5e (16 MiB default scoped VMEM); capped well
    # below v7x's 64 MiB physical per-core VMEM.
    lane_row = 128 * 4
    in_bytes = tb * 128 * jnp.dtype(hash_vector.dtype).itemsize
    out_bytes = rpt * _round_up(pack * out_dim, 128) * jnp.dtype(out_dtype).itemsize
    scr_bytes = tb * 128 * 4
    interm = 4 * tb * lane_row
    vmem_limit = 2 * (in_bytes + out_bytes) + scr_bytes + interm + (4 << 20)
    vmem_limit = int(max(16 << 20, min(vmem_limit, 56 << 20)))

    cost = pl.CostEstimate(
        flops=2 * B * (K * HIDDEN_DIM + HIDDEN_DIM * out_dim),
        transcendentals=0,
        bytes_accessed=(hash_vector.size * jnp.dtype(hash_vector.dtype).itemsize
                        + B * out_dim * jnp.dtype(out_dtype).itemsize
                        + 4 * (w1.size + b1.size + w2.size + b2.size)),
    )

    out = pl.pallas_call(
        _dhe_kernel,
        out_shape=jax.ShapeDtypeStruct((brow, pack * out_dim), out_dtype),
        grid=(num_tiles,),
        in_specs=[
            pl.BlockSpec((tb, K), lambda i: (i, 0)),       # batch tile, pipelined
            pl.BlockSpec(w1.shape, lambda i: (0, 0)),      # weights stay VMEM-resident
            pl.BlockSpec(b1.shape, lambda i: (0, 0)),
            pl.BlockSpec(w2.shape, lambda i: (0, 0)),
            pl.BlockSpec(b2.shape, lambda i: (0, 0)),
        ],
        out_specs=pl.BlockSpec((rpt, pack * out_dim), lambda i: (i, 0)),
        scratch_shapes=[pltpu.VMEM((tb, out_dim), jnp.float32)],
        compiler_params=pltpu.CompilerParams(
            dimension_semantics=("parallel",),
            vmem_limit_bytes=vmem_limit,
        ),
        cost_estimate=cost,
    )(hash_vector, w1, b1, w2, b2)

    emb = out.reshape(brow * pack, out_dim)   # free: row-major bitcast, no data movement
    if brow * pack != B:
        emb = emb[:B]                         # only pays a copy when B % pack != 0
    return emb


def init_params(key, num_hash_functions, output_dim):
    """Mimics PyTorch Linear default init; weights pre-transposed to (in, out), f32."""
    k1, k2, k3, k4 = jax.random.split(key, 4)
    bound1 = 1.0 / jnp.sqrt(num_hash_functions)
    w1 = jax.random.uniform(k1, (num_hash_functions, HIDDEN_DIM),
                            jnp.float32, -bound1, bound1)
    b1 = jax.random.uniform(k2, (1, HIDDEN_DIM), jnp.float32, -bound1, bound1)
    bound2 = 1.0 / jnp.sqrt(HIDDEN_DIM)
    w2 = jax.random.uniform(k3, (HIDDEN_DIM, output_dim),
                            jnp.float32, -bound2, bound2)
    b2 = jax.random.uniform(k4, (1, output_dim), jnp.float32, -bound2, bound2)
    return w1, b1, w2, b2


if __name__ == "__main__":
    key = jax.random.PRNGKey(0)
    k_in1, k_in2, k_params = jax.random.split(key, 3)

    embedding_dim = 16                       # output_dim of UserEmbeddingModel
    w1, b1, w2, b2 = init_params(k_params, NUM_HASH_FUNCTIONS, embedding_dim)

    def reference(hv):
        x = hv.astype(jnp.float32)
        h = jnp.maximum(jnp.dot(x, w1, precision=jax.lax.Precision.HIGHEST) + b1, 0.0)
        return jnp.dot(h, w2, precision=jax.lax.Precision.HIGHEST) + b2

    # Case 1: multi-tile grid with ragged last input/output blocks (B=200, 64-row tiles).
    batch = 200
    hv = jax.random.randint(k_in1, (batch, NUM_HASH_FUNCTIONS), 0, 32, dtype=jnp.int32)
    out = user_embedding_forward(hv, w1, b1, w2, b2, block_batch=64)
    jax.block_until_ready(out)
    assert out.shape == (batch, embedding_dim)
    ref = reference(hv)
    err = float(jnp.max(jnp.abs(out - ref)) / (jnp.max(jnp.abs(ref)) + 1e-9))
    assert err < 2e-2, f"case1 max relative error {err}"

    # Case 2: B not a multiple of the 8-row lane pack -> exercises the tail-slice path.
    batch2 = 13
    hv2 = jax.random.randint(k_in2, (batch2, NUM_HASH_FUNCTIONS), 0, 32, dtype=jnp.int32)
    out2 = user_embedding_forward(hv2, w1, b1, w2, b2, block_batch=64)
    jax.block_until_ready(out2)
    assert out2.shape == (batch2, embedding_dim)
    ref2 = reference(hv2)
    err2 = float(jnp.max(jnp.abs(out2 - ref2)) / (jnp.max(jnp.abs(ref2)) + 1e-9))
    assert err2 < 2e-2, f"case2 max relative error {err2}"

    print("KERNEL_OK")
</pallas_src>

<mosaic_0001>
module attributes {stable_mosaic.version = 11 : i64} {
  func.func @_dhe_kernel(%arg0: i32, %arg1: memref<64x4xi32, #tpu.memory_space<vmem>>, %arg2: memref<4x128xf32, #tpu.memory_space<vmem>>, %arg3: memref<1x128xf32, #tpu.memory_space<vmem>>, %arg4: memref<128x16xf32, #tpu.memory_space<vmem>>, %arg5: memref<1x16xf32, #tpu.memory_space<vmem>>, %arg6: memref<8x128xf32, #tpu.memory_space<vmem>>, %arg7: memref<64x16xf32, #tpu.memory_space<vmem>>) attributes {dimension_semantics = [#tpu.dimension_semantics<parallel>], iteration_bounds = array<i64: 4>, scalar_prefetch = 0 : i64, scratch_operands = 1 : i64, tpu.core_type = #tpu.core_type<tc>, window_params = [{transform_indices = @transform_0, window_bounds = array<i64: 64, 4>}, {pipeline_mode = #tpu.pipeline_mode<synchronous>, transform_indices = @transform_1, window_bounds = array<i64: 4, 128>}, {pipeline_mode = #tpu.pipeline_mode<synchronous>, transform_indices = @transform_2, window_bounds = array<i64: 1, 128>}, {pipeline_mode = #tpu.pipeline_mode<synchronous>, transform_indices = @transform_3, window_bounds = array<i64: 128, 16>}, {pipeline_mode = #tpu.pipeline_mode<synchronous>, transform_indices = @transform_4, window_bounds = array<i64: 1, 16>}, {transform_indices = @transform_5, window_bounds = array<i64: 8, 128>}]} {
    %c0 = arith.constant 0 : index
    %c0_0 = arith.constant 0 : index
    %0 = vector.load %arg1[%c0, %c0_0] : memref<64x4xi32, #tpu.memory_space<vmem>>, vector<64x4xi32>
    %1 = arith.sitofp %0 : vector<64x4xi32> to vector<64x4xf32>
    %c0_1 = arith.constant 0 : index
    %c0_2 = arith.constant 0 : index
    %2 = vector.load %arg2[%c0_1, %c0_2] : memref<4x128xf32, #tpu.memory_space<vmem>>, vector<4x128xf32>
    %3 = vector.extract_strided_slice %1 {offsets = [0, 0], sizes = [64, 1], strides = [1, 1]} : vector<64x4xf32> to vector<64x1xf32>
    %4 = vector.extract_strided_slice %2 {offsets = [0, 0], sizes = [1, 128], strides = [1, 1]} : vector<4x128xf32> to vector<1x128xf32>
    %5 = vector.broadcast %3 : vector<64x1xf32> to vector<64x128xf32>
    %6 = vector.broadcast %4 : vector<1x128xf32> to vector<64x128xf32>
    %7 = arith.mulf %5, %6 : vector<64x128xf32>
    %c0_3 = arith.constant 0 : index
    %c0_4 = arith.constant 0 : index
    %8 = vector.load %arg3[%c0_3, %c0_4] : memref<1x128xf32, #tpu.memory_space<vmem>>, vector<1x128xf32>
    %9 = vector.broadcast %8 : vector<1x128xf32> to vector<64x128xf32>
    %10 = arith.addf %7, %9 : vector<64x128xf32>
    %11 = vector.extract_strided_slice %1 {offsets = [0, 1], sizes = [64, 1], strides = [1, 1]} : vector<64x4xf32> to vector<64x1xf32>
    %12 = vector.extract_strided_slice %2 {offsets = [1, 0], sizes = [1, 128], strides = [1, 1]} : vector<4x128xf32> to vector<1x128xf32>
    %13 = vector.broadcast %11 : vector<64x1xf32> to vector<64x128xf32>
    %14 = vector.broadcast %12 : vector<1x128xf32> to vector<64x128xf32>
    %15 = arith.mulf %13, %14 : vector<64x128xf32>
    %16 = arith.addf %10, %15 : vector<64x128xf32>
    %17 = vector.extract_strided_slice %1 {offsets = [0, 2], sizes = [64, 1], strides = [1, 1]} : vector<64x4xf32> to vector<64x1xf32>
    %18 = vector.extract_strided_slice %2 {offsets = [2, 0], sizes = [1, 128], strides = [1, 1]} : vector<4x128xf32> to vector<1x128xf32>
    %19 = vector.broadcast %17 : vector<64x1xf32> to vector<64x128xf32>
    %20 = vector.broadcast %18 : vector<1x128xf32> to vector<64x128xf32>
    %21 = arith.mulf %19, %20 : vector<64x128xf32>
    %22 = arith.addf %16, %21 : vector<64x128xf32>
    %23 = vector.extract_strided_slice %1 {offsets = [0, 3], sizes = [64, 1], strides = [1, 1]} : vector<64x4xf32> to vector<64x1xf32>
    %24 = vector.extract_strided_slice %2 {offsets = [3, 0], sizes = [1, 128], strides = [1, 1]} : vector<4x128xf32> to vector<1x128xf32>
    %25 = vector.broadcast %23 : vector<64x1xf32> to vector<64x128xf32>
    %26 = vector.broadcast %24 : vector<1x128xf32> to vector<64x128xf32>
    %27 = arith.mulf %25, %26 : vector<64x128xf32>
    %28 = arith.addf %22, %27 : vector<64x128xf32>
    %cst = arith.constant 0.000000e+00 : f32
    %29 = vector.broadcast %cst : f32 to vector<64x128xf32>
    %30 = arith.maximumf %28, %29 : vector<64x128xf32>
    %c0_5 = arith.constant 0 : index
    %c0_6 = arith.constant 0 : index
    %31 = vector.load %arg4[%c0_5, %c0_6] : memref<128x16xf32, #tpu.memory_space<vmem>>, vector<128x16xf32>
    %cst_7 = arith.constant dense<0.000000e+00> : vector<64x16xf32>
    %32 = tpu.matmul %30, %31, %cst_7 {dimension_numbers = #tpu.dot_dimension_numbers<[1], [0], [0], [1], [0, 0, 1, 1], [], []>} : vector<64x128xf32>, vector<128x16xf32>, vector<64x16xf32> -> vector<64x16xf32>
    %c0_8 = arith.constant 0 : index
    %c0_9 = arith.constant 0 : index
    %33 = vector.load %arg5[%c0_8, %c0_9] : memref<1x16xf32, #tpu.memory_space<vmem>>, vector<1x16xf32>
    %34 = vector.broadcast %33 : vector<1x16xf32> to vector<64x16xf32>
    %35 = arith.addf %32, %34 : vector<64x16xf32>
    %c0_10 = arith.constant 0 : index
    %c0_11 = arith.constant 0 : index
    %36 = vector.load %arg7[%c0_10, %c0_11] : memref<64x16xf32, #tpu.memory_space<vmem>>, vector<64x16xf32>
    tpu.vector_store %arg7[%c0_10, %c0_11], %35 {strides = array<i32>} : memref<64x16xf32, #tpu.memory_space<vmem>>, vector<64x16xf32>,
    %c0_12 = arith.constant 0 : index
    %c0_13 = arith.constant 0 : index
    %37 = tpu.strided_load %arg7[%c0_12, %c0_13] {strides = array<i32: 8, 1>} : memref<64x16xf32, #tpu.memory_space<vmem>>, vector<8x16xf32>
    %c0_14 = arith.constant 0 : index
    %c0_15 = arith.constant 0 : index
    %38 = vector.load %arg6[%c0_14, %c0_15] : memref<8x128xf32, #tpu.memory_space<vmem>>, vector<8x16xf32>
    tpu.vector_store %arg6[%c0_14, %c0_15], %37 {strides = array<i32>} : memref<8x128xf32, #tpu.memory_space<vmem>>, vector<8x16xf32>,
    %c1 = arith.constant 1 : index
    %c0_16 = arith.constant 0 : index
    %39 = tpu.strided_load %arg7[%c1, %c0_16] {strides = array<i32: 8, 1>} : memref<64x16xf32, #tpu.memory_space<vmem>>, vector<8x16xf32>
    %c0_17 = arith.constant 0 : index
    %c16 = arith.constant 16 : index
    %40 = vector.load %arg6[%c0_17, %c16] : memref<8x128xf32, #tpu.memory_space<vmem>>, vector<8x16xf32>
    tpu.vector_store %arg6[%c0_17, %c16], %39 {strides = array<i32>} : memref<8x128xf32, #tpu.memory_space<vmem>>, vector<8x16xf32>,
    %c2 = arith.constant 2 : index
    %c0_18 = arith.constant 0 : index
    %41 = tpu.strided_load %arg7[%c2, %c0_18] {strides = array<i32: 8, 1>} : memref<64x16xf32, #tpu.memory_space<vmem>>, vector<8x16xf32>
    %c0_19 = arith.constant 0 : index
    %c32 = arith.constant 32 : index
    %42 = vector.load %arg6[%c0_19, %c32] : memref<8x128xf32, #tpu.memory_space<vmem>>, vector<8x16xf32>
    tpu.vector_store %arg6[%c0_19, %c32], %41 {strides = array<i32>} : memref<8x128xf32, #tpu.memory_space<vmem>>, vector<8x16xf32>,
    %c3 = arith.constant 3 : index
    %c0_20 = arith.constant 0 : index
    %43 = tpu.strided_load %arg7[%c3, %c0_20] {strides = array<i32: 8, 1>} : memref<64x16xf32, #tpu.memory_space<vmem>>, vector<8x16xf32>
    %c0_21 = arith.constant 0 : index
    %c48 = arith.constant 48 : index
    %44 = vector.load %arg6[%c0_21, %c48] : memref<8x128xf32, #tpu.memory_space<vmem>>, vector<8x16xf32>
    tpu.vector_store %arg6[%c0_21, %c48], %43 {strides = array<i32>} : memref<8x128xf32, #tpu.memory_space<vmem>>, vector<8x16xf32>,
    %c4 = arith.constant 4 : index
    %c0_22 = arith.constant 0 : index
    %45 = tpu.strided_load %arg7[%c4, %c0_22] {strides = array<i32: 8, 1>} : memref<64x16xf32, #tpu.memory_space<vmem>>, vector<8x16xf32>
    %c0_23 = arith.constant 0 : index
    %c64 = arith.constant 64 : index
    %46 = vector.load %arg6[%c0_23, %c64] : memref<8x128xf32, #tpu.memory_space<vmem>>, vector<8x16xf32>
    tpu.vector_store %arg6[%c0_23, %c64], %45 {strides = array<i32>} : memref<8x128xf32, #tpu.memory_space<vmem>>, vector<8x16xf32>,
    %c5 = arith.constant 5 : index
    %c0_24 = arith.constant 0 : index
    %47 = tpu.strided_load %arg7[%c5, %c0_24] {strides = array<i32: 8, 1>} : memref<64x16xf32, #tpu.memory_space<vmem>>, vector<8x16xf32>
    %c0_25 = arith.constant 0 : index
    %c80 = arith.constant 80 : index
    %48 = vector.load %arg6[%c0_25, %c80] : memref<8x128xf32, #tpu.memory_space<vmem>>, vector<8x16xf32>
    tpu.vector_store %arg6[%c0_25, %c80], %47 {strides = array<i32>} : memref<8x128xf32, #tpu.memory_space<vmem>>, vector<8x16xf32>,
    %c6 = arith.constant 6 : index
    %c0_26 = arith.constant 0 : index
    %49 = tpu.strided_load %arg7[%c6, %c0_26] {strides = array<i32: 8, 1>} : memref<64x16xf32, #tpu.memory_space<vmem>>, vector<8x16xf32>
    %c0_27 = arith.constant 0 : index
    %c96 = arith.constant 96 : index
    %50 = vector.load %arg6[%c0_27, %c96] : memref<8x128xf32, #tpu.memory_space<vmem>>, vector<8x16xf32>
    tpu.vector_store %arg6[%c0_27, %c96], %49 {strides = array<i32>} : memref<8x128xf32, #tpu.memory_space<vmem>>, vector<8x16xf32>,
    %c7 = arith.constant 7 : index
    %c0_28 = arith.constant 0 : index
    %51 = tpu.strided_load %arg7[%c7, %c0_28] {strides = array<i32: 8, 1>} : memref<64x16xf32, #tpu.memory_space<vmem>>, vector<8x16xf32>
    %c0_29 = arith.constant 0 : index
    %c112 = arith.constant 112 : index
    %52 = vector.load %arg6[%c0_29, %c112] : memref<8x128xf32, #tpu.memory_space<vmem>>, vector<8x16xf32>
    tpu.vector_store %arg6[%c0_29, %c112], %51 {strides = array<i32>} : memref<8x128xf32, #tpu.memory_space<vmem>>, vector<8x16xf32>,
    return
  }
  func.func @transform_0(%arg0: i32) -> (i32, i32) {
    %c0_i32 = arith.constant 0 : i32
    %c0_i32_0 = arith.constant 0 : i32
    return %arg0, %c0_i32 : i32, i32
  }
  func.func @transform_1(%arg0: i32) -> (i32, i32) {
    %c0_i32 = arith.constant 0 : i32
    %c0_i32_0 = arith.constant 0 : i32
    %c0_i32_1 = arith.constant 0 : i32
    return %c0_i32, %c0_i32_0 : i32, i32
  }
  func.func @transform_2(%arg0: i32) -> (i32, i32) {
    %c0_i32 = arith.constant 0 : i32
    %c0_i32_0 = arith.constant 0 : i32
    %c0_i32_1 = arith.constant 0 : i32
    return %c0_i32, %c0_i32_0 : i32, i32
  }
  func.func @transform_3(%arg0: i32) -> (i32, i32) {
    %c0_i32 = arith.constant 0 : i32
    %c0_i32_0 = arith.constant 0 : i32
    %c0_i32_1 = arith.constant 0 : i32
    return %c0_i32, %c0_i32_0 : i32, i32
  }
  func.func @transform_4(%arg0: i32) -> (i32, i32) {
    %c0_i32 = arith.constant 0 : i32
    %c0_i32_0 = arith.constant 0 : i32
    %c0_i32_1 = arith.constant 0 : i32
    return %c0_i32, %c0_i32_0 : i32, i32
  }
  func.func @transform_5(%arg0: i32) -> (i32, i32) {
    %c0_i32 = arith.constant 0 : i32
    %c0_i32_0 = arith.constant 0 : i32
    return %arg0, %c0_i32 : i32, i32
  }
}

</mosaic_0001>

<llo_original>
// kernel: user_embedding_forward.1
$region0: #{user_embedding_forward.1}
  #allocation0 [shape = 'u32[]', space=smem, size = 0x4, offset = 0x4, fixed_abs, tag = 'smem constant byte address 0x4 - core index']
  #allocation1 [shape = 'u32[144,128]{1,0:T(1,128)}', space=vmem, size = 0x12000, scoped, tag = 'internal scratch']
  #allocation2 [shape = 'f32[64,16]{1,0:T(8,128)}', space=vmem, size = 0x8000, scoped, tag = 'scratch operand']
  %s0 = inlined_call_operand.vmem [shape: s32[200,4], index: 0, kind: input, shape index: {}]
  %s1 = inlined_call_operand.vmem [shape: f32[4,128], index: 1, kind: input, shape index: {}]
  %s2 = inlined_call_operand.vmem [shape: f32[1,128], index: 2, kind: input, shape index: {}]
  %s3 = inlined_call_operand.vmem [shape: f32[128,16], index: 3, kind: input, shape index: {}]
  %s4 = inlined_call_operand.vmem [shape: f32[1,16], index: 4, kind: input, shape index: {}]
  %s5 = inlined_call_operand.vmem [shape: f32[25,128], index: 5, kind: output, shape index: {}]
  %s6 = sld [smem:[#allocation0]]
  $region53: #{user_embedding_forward.1} parent=0
    _
  %s8 = ssub.s32 1, %s6
  %s9 = scalar_select 0, %s8, %s6
  loop: start=0, step=1, limit=6
  $region2: #{user_embedding_forward.1} parent=0 // loop_pre_header
    _
  $region3: #{user_embedding_forward.1} parent=0 // loop_header
    %s11 = sphi 0, %s15
    %p12 = scmp.ge.s32.totalorder %s11, 6
    %s21 = sphi 0, %s23
    %s24 = sphi 0, %s21
    %s25 = sphi 0, %s24
    %s41 = sphi 0, %s25
    %s45 = sphi 0, %s45
    %s47 = sphi 0, %s45
    %s48 = sphi 0, %s47
    %s62 = sphi 0, %s48
    %s66 = sphi 0, %s66
    %s68 = sphi 0, %s66
    %s69 = sphi 0, %s68
    %s83 = sphi 0, %s69
    %s87 = sphi 0, %s87
    %s89 = sphi 0, %s87
    %s90 = sphi 0, %s89
    %s104 = sphi 0, %s90
    %s108 = sphi 0, %s108
    %s110 = sphi 0, %s108
    %s111 = sphi 0, %s110
    %s125 = sphi 0, %s111
    %s131 = sphi 0, %s133
    %s134 = sphi 0, %s131
    %s135 = sphi 0, %s134
    %s151 = sphi 0, %s135
  $region4: #{user_embedding_forward.1} parent=0 // loop_header_branch
    %14 = sbr.rel (%p12) target = $region8
  $region5: #{user_embedding_forward.1} parent=0 // loop_body
    %s16 = ssub.s32 %s11, 1
    %s17 = ssub.s32 %s11, 2
    %s18 = sadd.s32 %s11, 1
    %s19 = ssub.s32 %s11, %s18
    %p20 = scmp.eq.s32.totalorder %s19, 0
    %s22 = sadd.s32 %s21, 1
    %s23 = scalar_select %p20, %s21, %s22
    %p26 = pneg %p20
    %p27 = scmp.eq.s32.totalorder %s11, 3
    %p28 = por %p26, %p27
    %p29 = scmp.ne.s32.totalorder %s21, %s24
    %p30 = scmp.eq.s32.totalorder %s11, 0
    %p31 = por %p29, %p30
    %p32 = scmp.ne.s32.totalorder %s21, %s24
    %p33 = scmp.eq.s32.totalorder %s16, 3
    %p34 = por %p32, %p33
    %p35 = scmp.ne.s32.totalorder %s24, %s25
    %p36 = scmp.eq.s32.totalorder %s16, 0
    %p37 = por %p35, %p36
    %p38 = scmp.ne.s32.totalorder %s24, %s25
    %p39 = scmp.eq.s32.totalorder %s17, 3
    %p40 = por %p38, %p39
    %p42 = scmp.ne.s32.totalorder %s25, %s41
    %p43 = scmp.eq.s32.totalorder %s17, 0
    %p44 = por %p42, %p43
    %s46 = sadd.s32 %s45, 1
    %p49 = scmp.eq.s32.totalorder %s11, 3
    %p50 = scmp.ne.s32.totalorder %s45, %s47
    %p51 = scmp.eq.s32.totalorder %s11, 0
    %p52 = por %p50, %p51
    %p53 = scmp.ne.s32.totalorder %s45, %s47
    %p54 = scmp.eq.s32.totalorder %s16, 3
    %p55 = por %p53, %p54
    %p56 = scmp.ne.s32.totalorder %s47, %s48
    %p57 = scmp.eq.s32.totalorder %s16, 0
    %p58 = por %p56, %p57
    %p59 = scmp.ne.s32.totalorder %s47, %s48
    %p60 = scmp.eq.s32.totalorder %s17, 3
    %p61 = por %p59, %p60
    %p63 = scmp.ne.s32.totalorder %s48, %s62
    %p64 = scmp.eq.s32.totalorder %s17, 0
    %p65 = por %p63, %p64
    %s67 = sadd.s32 %s66, 1
    %p70 = scmp.eq.s32.totalorder %s11, 3
    %p71 = scmp.ne.s32.totalorder %s66, %s68
    %p72 = scmp.eq.s32.totalorder %s11, 0
    %p73 = por %p71, %p72
    %p74 = scmp.ne.s32.totalorder %s66, %s68
    %p75 = scmp.eq.s32.totalorder %s16, 3
    %p76 = por %p74, %p75
    %p77 = scmp.ne.s32.totalorder %s68, %s69
    %p78 = scmp.eq.s32.totalorder %s16, 0
    %p79 = por %p77, %p78
    %p80 = scmp.ne.s32.totalorder %s68, %s69
    %p81 = scmp.eq.s32.totalorder %s17, 3
    %p82 = por %p80, %p81
    %p84 = scmp.ne.s32.totalorder %s69, %s83
    %p85 = scmp.eq.s32.totalorder %s17, 0
    %p86 = por %p84, %p85
    %s88 = sadd.s32 %s87, 1
    %p91 = scmp.eq.s32.totalorder %s11, 3
    %p92 = scmp.ne.s32.totalorder %s87, %s89
    %p93 = scmp.eq.s32.totalorder %s11, 0
    %p94 = por %p92, %p93
    %p95 = scmp.ne.s32.totalorder %s87, %s89
    %p96 = scmp.eq.s32.totalorder %s16, 3
    %p97 = por %p95, %p96
    %p98 = scmp.ne.s32.totalorder %s89, %s90
    %p99 = scmp.eq.s32.totalorder %s16, 0
    %p100 = por %p98, %p99
    %p101 = scmp.ne.s32.totalorder %s89, %s90
    %p102 = scmp.eq.s32.totalorder %s17, 3
    %p103 = por %p101, %p102
    %p105 = scmp.ne.s32.totalorder %s90, %s104
    %p106 = scmp.eq.s32.totalorder %s17, 0
    %p107 = por %p105, %p106
    %s109 = sadd.s32 %s108, 1
    %p112 = scmp.eq.s32.totalorder %s11, 3
    %p113 = scmp.ne.s32.totalorder %s108, %s110
    %p114 = scmp.eq.s32.totalorder %s11, 0
    %p115 = por %p113, %p114
    %p116 = scmp.ne.s32.totalorder %s108, %s110
    %p117 = scmp.eq.s32.totalorder %s16, 3
    %p118 = por %p116, %p117
    %p119 = scmp.ne.s32.totalorder %s110, %s111
    %p120 = scmp.eq.s32.totalorder %s16, 0
    %p121 = por %p119, %p120
    %p122 = scmp.ne.s32.totalorder %s110, %s111
    %p123 = scmp.eq.s32.totalorder %s17, 3
    %p124 = por %p122, %p123
    %p126 = scmp.ne.s32.totalorder %s111, %s125
    %p127 = scmp.eq.s32.totalorder %s17, 0
    %p128 = por %p126, %p127
    %s129 = ssub.s32 %s11, %s18
    %p130 = scmp.eq.s32.totalorder %s129, 0
    %s132 = sadd.s32 %s131, 1
    %s133 = scalar_select %p130, %s131, %s132
    %p136 = pneg %p130
    %p137 = scmp.eq.s32.totalorder %s11, 3
    %p138 = por %p136, %p137
    %p139 = scmp.ne.s32.totalorder %s131, %s134
    %p140 = scmp.eq.s32.totalorder %s11, 0
    %p141 = por %p139, %p140
    %p142 = scmp.ne.s32.totalorder %s131, %s134
    %p143 = scmp.eq.s32.totalorder %s16, 3
    %p144 = por %p142, %p143
    %p145 = scmp.ne.s32.totalorder %s134, %s135
    %p146 = scmp.eq.s32.totalorder %s16, 0
    %p147 = por %p145, %p146
    %p148 = scmp.ne.s32.totalorder %s134, %s135
    %p149 = scmp.eq.s32.totalorder %s17, 3
    %p150 = por %p148, %p149
    %p152 = scmp.ne.s32.totalorder %s135, %s151
    %p153 = scmp.eq.s32.totalorder %s17, 0
    %p154 = por %p152, %p153
    %p155 = scmp.le.s32.totalorder 1, %s11
    %p156 = scmp.lt.s32.totalorder %s11, 5
    %p157 = pnand %p155, %p156
    %p158 = pneg %p157
    // Predicated region
    $region9: #{user_embedding_forward.1} parent=5 // pred_check
      _
    $region10: #{user_embedding_forward.1} parent=5 // pred_check_branch
      %160 = sbr.rel (%p157) target = $region12
    $region11: #{user_embedding_forward.1} parent=5 // pred_region
      %s161 = ssub.s32 %s11, 1
      // Predicated region
      $region13: #{user_embedding_forward.1} parent=11 // pred_check
        %p162 = pneg %p58
      $region14: #{user_embedding_forward.1} parent=11 // pred_check_branch
        %164 = sbr.rel (%p162) target = $region16
      $region15: #{user_embedding_forward.1} parent=11 // pred_region
        _
      $region16: #{user_embedding_forward.1} parent=11 // pred_fallthru
        _
      // Predicated region
      $region17: #{user_embedding_forward.1} parent=11 // pred_check
        %p165 = pneg %p79
      $region18: #{user_embedding_forward.1} parent=11 // pred_check_branch
        %167 = sbr.rel (%p165) target = $region20
      $region19: #{user_embedding_forward.1} parent=11 // pred_region
        _
      $region20: #{user_embedding_forward.1} parent=11 // pred_fallthru
        _
      // Predicated region
      $region21: #{user_embedding_forward.1} parent=11 // pred_check
        %p168 = pneg %p100
      $region22: #{user_embedding_forward.1} parent=11 // pred_check_branch
        %170 = sbr.rel (%p168) target = $region24
      $region23: #{user_embedding_forward.1} parent=11 // pred_region
        _
      $region24: #{user_embedding_forward.1} parent=11 // pred_fallthru
        _
      // Predicated region
      $region25: #{user_embedding_forward.1} parent=11 // pred_check
        %p171 = pneg %p121
      $region26: #{user_embedding_forward.1} parent=11 // pred_check_branch
        %173 = sbr.rel (%p171) target = $region28
      $region27: #{user_embedding_forward.1} parent=11 // pred_region
        _
      $region28: #{user_embedding_forward.1} parent=11 // pred_fallthru
        _
    $region12: #{user_embedding_forward.1} parent=5 // pred_fallthru
      _
    %p174 = scmp.lt.s32.totalorder %s11, 4
    // Predicated region
    $region29: #{user_embedding_forward.1} parent=5 // pred_check
      %p175 = pneg %p174
    $region30: #{user_embedding_forward.1} parent=5 // pred_check_branch
      %177 = sbr.rel (%p175) target = $region32
    $region31: #{user_embedding_forward.1} parent=5 // pred_region
      // Predicated region
      $region33: #{user_embedding_forward.1} parent=31 // pred_check
        %p178 = pneg %p31
      $region34: #{user_embedding_forward.1} parent=31 // pred_check_branch
        %180 = sbr.rel (%p178) target = $region36
      $region35: #{user_embedding_forward.1} parent=31 // pred_region
        %s181 = smul.u32 8, %s11
        %s182 = ssub.s32 25, %s181
        %p183 = scmp.lt.s32.totalorder %s182, 8
        %s184 = scalar_select %p183, %s182, 8
        %s185 = smul.u32 128, %s184
        %p186 = scmp.lt.s32.totalorder %s181, 24
        %s187 = scalar_select %p186, %s181, 24
        %s188 = smul.addr %s187, 8
        %s189 = scalar_lea.vmem %s0, %s188
        %s190 = smul.u32 8, %s11
        %s191 = ssub.s32 25, %s190
        %p192 = scmp.lt.s32.totalorder %s191, 8
        %s193 = scalar_select %p192, %s191, 8
        %s194 = smul.u32 128, %s193
      $region36: #{user_embedding_forward.1} parent=31 // pred_fallthru
        _
    $region32: #{user_embedding_forward.1} parent=5 // pred_fallthru
      _
    %p195 = scmp.le.s32.totalorder 1, %s11
    %p196 = scmp.lt.s32.totalorder %s11, 5
    %p197 = pnand %p195, %p196
    %p198 = pneg %p197
    // Predicated region
    $region37: #{user_embedding_forward.1} parent=5 // pred_check
      _
    $region38: #{user_embedding_forward.1} parent=5 // pred_check_branch
      %200 = sbr.rel (%p197) target = $region40
    $region39: #{user_embedding_forward.1} parent=5 // pred_region
      %s201 = ssub.s32 %s11, 1
      %s202 = smul.u32 8, %s16
      %s203 = ssub.s32 25, %s202
      %p204 = scmp.lt.s32.totalorder %s203, 8
      %s205 = scalar_select %p204, %s203, 8
      %s206 = smul.u32 128, %s205
      %p207 = scmp.lt.s32.totalorder %s202, 24
      %s208 = scalar_select %p207, %s202, 24
      %s209 = smul.addr %s208, 8
      %s210 = scalar_lea.vmem %s0, %s209
      %p211 = pneg %p37
      %p212 = pneg %p34
      %p213 = pneg %p58
      %p214 = pneg %p55
      %p215 = pneg %p79
      %p216 = pneg %p76
      %p217 = pneg %p100
      %p218 = pneg %p97
      %p219 = pneg %p121
      %p220 = pneg %p118
      %p221 = pneg %p147
      %p222 = pneg %p144
      %p223 = scmp.lt.s32.totalorder %s16, 3
      %s224 = scalar_select %p223, %s16, 3
      %s225 = smul.addr %s224, 8
      %s226 = scalar_lea.vmem %s5, %s225
      %s227 = smul.u32 8, %s16
      %s228 = ssub.s32 25, %s227
      %p229 = scmp.lt.s32.totalorder %s228, 8
      %s230 = scalar_select %p229, %s228, 8
      %s231 = smul.u32 128, %s230
      %p232 = scmp.lt.s32.totalorder %s227, 24
      %s233 = scalar_select %p232, %s227, 24
      %s234 = smul.addr %s233, 8
      %s235 = scalar_lea.vmem %s0, %s234
      %s236 = smul.u32 8, %s16
      %s237 = ssub.s32 25, %s236
      %p238 = scmp.lt.s32.totalorder %s237, 8
      %s239 = scalar_select %p238, %s237, 8
      %s240 = smul.u32 128, %s239
      %p241 = scmp.lt.s32.totalorder %s16, 3
      %s242 = scalar_select %p241, %s16, 3
      %s243 = smul.addr %s242, 8
      %s244 = scalar_lea.vmem %s5, %s243
      %v245 = vld [vmem:[%s235] sm:$0xff]
      %v246 = vld [vmem:[%s235 + $0x8] sm:$0xff]
      %v247 = vld [vmem:[%s235 + $0x10] sm:$0xff]
      %v248 = vld [vmem:[%s235 + $0x18] sm:$0xff]
      %v249 = vld [vmem:[%s235 + $0x20] sm:$0xff]
      %v250 = vld [vmem:[%s235 + $0x28] sm:$0xff]
      %v251 = vld [vmem:[%s235 + $0x30] sm:$0xff]
      %v252 = vld [vmem:[%s235 + $0x38] sm:$0xff]
      %v253 = vcvt.s32.f32 %v245
      %v254 = vcvt.s32.f32 %v246
      %v255 = vcvt.s32.f32 %v247
      %v256 = vcvt.s32.f32 %v248
      %v257 = vcvt.s32.f32 %v249
      %v258 = vcvt.s32.f32 %v250
      %v259 = vcvt.s32.f32 %v251
      %v260 = vcvt.s32.f32 %v252
      %v261 = vld [vmem:[%s1] sm:$0xf]
      %263 = vset.pattern.permute.xlu0 0
      %264 = vperm.xlu0 %263, %v253
      %v265 = vpop.permute.xlu0 %264
      %268 = vset.pattern.permute.xlu0 0
      %269 = vperm.xlu0 %268, %v254
      %v270 = vpop.permute.xlu0 %269
      %273 = vset.pattern.permute.xlu0 0
      %274 = vperm.xlu0 %273, %v255
      %v275 = vpop.permute.xlu0 %274
      %278 = vset.pattern.permute.xlu0 0
      %279 = vperm.xlu0 %278, %v256
      %v280 = vpop.permute.xlu0 %279
      %283 = vset.pattern.permute.xlu0 0
      %284 = vperm.xlu0 %283, %v257
      %v285 = vpop.permute.xlu0 %284
      %288 = vset.pattern.permute.xlu0 0
      %289 = vperm.xlu0 %288, %v258
      %v290 = vpop.permute.xlu0 %289
      %293 = vset.pattern.permute.xlu0 0
      %294 = vperm.xlu0 %293, %v259
      %v295 = vpop.permute.xlu0 %294
      %298 = vset.pattern.permute.xlu0 0
      %299 = vperm.xlu0 %298, %v260
      %v300 = vpop.permute.xlu0 %299
      %v302 = vlaneseq
      %v303 = vshrl.u32 %v302, 7
      %v304 = vsub.s32 0, %v303
      %v305 = vrot.slane %v261, %v304
      %v306 = vmul.f32 %v265, %v305
      %v307 = vmul.f32 %v270, %v305
      %v308 = vmul.f32 %v275, %v305
      %v309 = vmul.f32 %v280, %v305
      %v310 = vmul.f32 %v285, %v305
      %v311 = vmul.f32 %v290, %v305
      %v312 = vmul.f32 %v295, %v305
      %v313 = vmul.f32 %v300, %v305
      %v314 = vld [vmem:[%s2] sm:$0x1]
      %v316 = vlaneseq
      %v317 = vshrl.u32 %v316, 7
      %v318 = vsub.s32 0, %v317
      %v319 = vrot.slane %v314, %v318
      %v321 = vadd.f32 %v306, %v319
      %v322 = vadd.f32 %v307, %v319
      %v323 = vadd.f32 %v308, %v319
      %v324 = vadd.f32 %v309, %v319
      %v325 = vadd.f32 %v310, %v319
      %v326 = vadd.f32 %v311, %v319
      %v327 = vadd.f32 %v312, %v319
      %v328 = vadd.f32 %v313, %v319
      %329 = vset.pattern.permute.xlu0 1
      %330 = vperm.xlu0 %329, %v253
      %v331 = vpop.permute.xlu0 %330
      %333 = vset.pattern.permute.xlu0 1
      %334 = vperm.xlu0 %333, %v254
      %v335 = vpop.permute.xlu0 %334
      %337 = vset.pattern.permute.xlu0 1
      %338 = vperm.xlu0 %337, %v255
      %v339 = vpop.permute.xlu0 %338
      %341 = vset.pattern.permute.xlu0 1
      %342 = vperm.xlu0 %341, %v256
      %v343 = vpop.permute.xlu0 %342
      %345 = vset.pattern.permute.xlu0 1
      %346 = vperm.xlu0 %345, %v257
      %v347 = vpop.permute.xlu0 %346
      %349 = vset.pattern.permute.xlu0 1
      %350 = vperm.xlu0 %349, %v258
      %v351 = vpop.permute.xlu0 %350
      %353 = vset.pattern.permute.xlu0 1
      %354 = vperm.xlu0 %353, %v259
      %v355 = vpop.permute.xlu0 %354
      %357 = vset.pattern.permute.xlu0 1
      %358 = vperm.xlu0 %357, %v260
      %v359 = vpop.permute.xlu0 %358
      %v361 = vlaneseq
      %v362 = vshrl.u32 %v361, 7
      %v363 = vsub.s32 1, %v362
      %v364 = vrot.slane %v261, %v363
      %v365 = vmul.f32 %v331, %v364
      %v366 = vmul.f32 %v335, %v364
      %v367 = vmul.f32 %v339, %v364
      %v368 = vmul.f32 %v343, %v364
      %v369 = vmul.f32 %v347, %v364
      %v370 = vmul.f32 %v351, %v364
      %v371 = vmul.f32 %v355, %v364
      %v372 = vmul.f32 %v359, %v364
      %v373 = vadd.f32 %v321, %v365
      %v374 = vadd.f32 %v322, %v366
      %v375 = vadd.f32 %v323, %v367
      %v376 = vadd.f32 %v324, %v368
      %v377 = vadd.f32 %v325, %v369
      %v378 = vadd.f32 %v326, %v370
      %v379 = vadd.f32 %v327, %v371
      %v380 = vadd.f32 %v328, %v372
      %381 = vset.pattern.permute.xlu0 2
      %382 = vperm.xlu0 %381, %v253
      %v383 = vpop.permute.xlu0 %382
      %385 = vset.pattern.permute.xlu0 2
      %386 = vperm.xlu0 %385, %v254
      %v387 = vpop.permute.xlu0 %386
      %389 = vset.pattern.permute.xlu0 2
      %390 = vperm.xlu0 %389, %v255
      %v391 = vpop.permute.xlu0 %390
      %393 = vset.pattern.permute.xlu0 2
      %394 = vperm.xlu0 %393, %v256
      %v395 = vpop.permute.xlu0 %394
      %397 = vset.pattern.permute.xlu0 2
      %398 = vperm.xlu0 %397, %v257
      %v399 = vpop.permute.xlu0 %398
      %401 = vset.pattern.permute.xlu0 2
      %402 = vperm.xlu0 %401, %v258
      %v403 = vpop.permute.xlu0 %402
      %405 = vset.pattern.permute.xlu0 2
      %406 = vperm.xlu0 %405, %v259
      %v407 = vpop.permute.xlu0 %406
      %409 = vset.pattern.permute.xlu0 2
      %410 = vperm.xlu0 %409, %v260
      %v411 = vpop.permute.xlu0 %410
      %v413 = vlaneseq
      %v414 = vshrl.u32 %v413, 7
      %v415 = vsub.s32 2, %v414
      %v416 = vrot.slane %v261, %v415
      %v417 = vmul.f32 %v383, %v416
      %v418 = vmul.f32 %v387, %v416
      %v419 = vmul.f32 %v391, %v416
      %v420 = vmul.f32 %v395, %v416
      %v421 = vmul.f32 %v399, %v416
      %v422 = vmul.f32 %v403, %v416
      %v423 = vmul.f32 %v407, %v416
      %v424 = vmul.f32 %v411, %v416
      %v425 = vadd.f32 %v373, %v417
      %v426 = vadd.f32 %v374, %v418
      %v427 = vadd.f32 %v375, %v419
      %v428 = vadd.f32 %v376, %v420
      %v429 = vadd.f32 %v377, %v421
      %v430 = vadd.f32 %v378, %v422
      %v431 = vadd.f32 %v379, %v423
      %v432 = vadd.f32 %v380, %v424
      %433 = vset.pattern.permute.xlu0 3
      %434 = vperm.xlu0 %433, %v253
      %v435 = vpop.permute.xlu0 %434
      %437 = vset.pattern.permute.xlu0 3
      %438 = vperm.xlu0 %437, %v254
      %v439 = vpop.permute.xlu0 %438
      %441 = vset.pattern.permute.xlu0 3
      %442 = vperm.xlu0 %441, %v255
      %v443 = vpop.permute.xlu0 %442
      %445 = vset.pattern.permute.xlu0 3
      %446 = vperm.xlu0 %445, %v256
      %v447 = vpop.permute.xlu0 %446
      %449 = vset.pattern.permute.xlu0 3
      %450 = vperm.xlu0 %449, %v257
      %v451 = vpop.permute.xlu0 %450
      %453 = vset.pattern.permute.xlu0 3
      %454 = vperm.xlu0 %453, %v258
      %v455 = vpop.permute.xlu0 %454
      %457 = vset.pattern.permute.xlu0 3
      %458 = vperm.xlu0 %457, %v259
      %v459 = vpop.permute.xlu0 %458
      %461 = vset.pattern.permute.xlu0 3
      %462 = vperm.xlu0 %461, %v260
      %v463 = vpop.permute.xlu0 %462
      %v465 = vlaneseq
      %v466 = vshrl.u32 %v465, 7
      %v467 = vsub.s32 3, %v466
      %v468 = vrot.slane %v261, %v467
      %v469 = vmul.f32 %v435, %v468
      %v470 = vmul.f32 %v439, %v468
      %v471 = vmul.f32 %v443, %v468
      %v472 = vmul.f32 %v447, %v468
      %v473 = vmul.f32 %v451, %v468
      %v474 = vmul.f32 %v455, %v468
      %v475 = vmul.f32 %v459, %v468
      %v476 = vmul.f32 %v463, %v468
      %v477 = vadd.f32 %v425, %v469
      %v478 = vadd.f32 %v426, %v470
      %v479 = vadd.f32 %v427, %v471
      %v480 = vadd.f32 %v428, %v472
      %v481 = vadd.f32 %v429, %v473
      %v482 = vadd.f32 %v430, %v474
      %v483 = vadd.f32 %v431, %v475
      %v484 = vadd.f32 %v432, %v476
      %v485 = vmax.f32 %v477, 0.0
      %v486 = vmax.f32 %v478, 0.0
      %v487 = vmax.f32 %v479, 0.0
      %v488 = vmax.f32 %v480, 0.0
      %v489 = vmax.f32 %v481, 0.0
      %v490 = vmax.f32 %v482, 0.0
      %v491 = vmax.f32 %v483, 0.0
      %v492 = vmax.f32 %v484, 0.0
      %v493 = vld [vmem:[%s3] sm:$0xff]
      %v494 = vld [vmem:[%s3 + $0x8] sm:$0xff]
      %v495 = vld [vmem:[%s3 + $0x10] sm:$0xff]
      %v496 = vld [vmem:[%s3 + $0x18] sm:$0xff]
      %v497 = vld [vmem:[%s3 + $0x20] sm:$0xff]
      %v498 = vld [vmem:[%s3 + $0x28] sm:$0xff]
      %v499 = vld [vmem:[%s3 + $0x30] sm:$0xff]
      %v500 = vld [vmem:[%s3 + $0x38] sm:$0xff]
      %v501 = vld [vmem:[%s3 + $0x40] sm:$0xff]
      %v502 = vld [vmem:[%s3 + $0x48] sm:$0xff]
      %v503 = vld [vmem:[%s3 + $0x50] sm:$0xff]
      %v504 = vld [vmem:[%s3 + $0x58] sm:$0xff]
      %v505 = vld [vmem:[%s3 + $0x60] sm:$0xff]
      %v506 = vld [vmem:[%s3 + $0x68] sm:$0xff]
      %v507 = vld [vmem:[%s3 + $0x70] sm:$0xff]
      %v508 = vld [vmem:[%s3 + $0x78] sm:$0xff]
      %v509 = vld [vmem:[%s4] sm:$0x1]
      %v511 = vlaneseq
      %v512 = vshrl.u32 %v511, 7
      %v513 = vsub.s32 0, %v512
      %v514 = vrot.slane %v509, %v513
      %516 = vmatprep.subr.mxu0 0.0
      %517 = vmatpush1.msra.mxu0 %v493
      %518 = vmatprep.subr.mxu0 0.0
      %519 = vmatpush1.msra.mxu0 %v494
      %520 = vmatprep.subr.mxu0 0.0
      %521 = vmatpush1.msra.mxu0 %v495
      %522 = vmatprep.subr.mxu0 0.0
      %523 = vmatpush1.msra.mxu0 %v496
      %524 = vmatprep.subr.mxu0 0.0
      %525 = vmatpush1.msra.mxu0 %v497
      %526 = vmatprep.subr.mxu0 0.0
      %527 = vmatpush1.msra.mxu0 %v498
      %528 = vmatprep.subr.mxu0 0.0
      %529 = vmatpush1.msra.mxu0 %v499
      %530 = vmatprep.subr.mxu0 0.0
      %531 = vmatpush1.msra.mxu0 %v500
      %532 = vmatprep.subr.mxu0 0.0
      %533 = vmatpush1.msra.mxu0 %v501
      %534 = vmatprep.subr.mxu0 0.0
      %535 = vmatpush1.msra.mxu0 %v502
      %536 = vmatprep.subr.mxu0 0.0
      %537 = vmatpush1.msra.mxu0 %v503
      %538 = vmatprep.subr.mxu0 0.0
      %539 = vmatpush1.msra.mxu0 %v504
      %540 = vmatprep.subr.mxu0 0.0
      %541 = vmatpush1.msra.mxu0 %v505
      %542 = vmatprep.subr.mxu0 0.0
      %543 = vmatpush1.msra.mxu0 %v506
      %544 = vmatprep.subr.mxu0 0.0
      %545 = vmatpush1.msra.mxu0 %v507
      %546 = vmatprep.subr.mxu0 0.0
      %547 = vmatpush1.msra.mxu0 %v508
      %548 = vmatprep.subr.mxu0 0.0
      %549 = vmatpush1.msra.mxu0 0.0
      %550 = vmatprep.subr.mxu0 0.0
      %551 = vmatpush1.msra.mxu0 0.0
      %552 = vmatprep.subr.mxu0 0.0
      %553 = vmatpush1.msra.mxu0 0.0
      %554 = vmatprep.subr.mxu0 0.0
      %555 = vmatpush1.msra.mxu0 0.0
      %556 = vmatprep.subr.mxu0 0.0
      %557 = vmatpush1.msra.mxu0 0.0
      %558 = vmatprep.subr.mxu0 0.0
      %559 = vmatpush1.msra.mxu0 0.0
      %560 = vmatprep.subr.mxu0 0.0
      %561 = vmatpush1.msra.mxu0 0.0
      %562 = vmatprep.subr.mxu0 0.0
      %563 = vmatpush1.msra.mxu0 0.0
      %564 = vmatprep.subr.mxu0 0.0
      %565 = vmatpush1.msra.mxu0 0.0
      %566 = vmatprep.subr.mxu0 0.0
      %567 = vmatpush1.msra.mxu0 0.0
      %568 = vmatprep.subr.mxu0 0.0
      %569 = vmatpush1.msra.mxu0 0.0
      %570 = vmatprep.subr.mxu0 0.0
      %571 = vmatpush1.msra.mxu0 0.0
      %572 = vmatprep.subr.mxu0 0.0
      %573 = vmatpush1.msra.mxu0 0.0
      %574 = vmatprep.subr.mxu0 0.0
      %575 = vmatpush1.msra.mxu0 0.0
      %576 = vmatprep.subr.mxu0 0.0
      %577 = vmatpush1.msra.mxu0 0.0
      %578 = vmatprep.subr.mxu0 0.0
      %579 = vmatpush1.msra.mxu0 0.0
      %580 = vmatprep.mubr.f32.mxu0 0.0
      %581 = vmatmul.mubr.f32.gmra.mrb[0].mxu0 %v485
      %v582 = vpop.f32.mrb[0].mxu0
      %v583 = vadd.f32 %v514, %v582
      %v584 = vpop.f32.mrb[0].mxu0
      %585 = vmatprep.mubr.f32.mxu0 0.0
      %586 = vmatmul.mubr.f32.gmra.mrb[0].mxu0 %v486
      %v587 = vpop.f32.mrb[0].mxu0
      %v588 = vadd.f32 %v514, %v587
      %v589 = vpop.f32.mrb[0].mxu0
      %590 = vmatprep.mubr.f32.mxu0 0.0
      %591 = vmatmul.mubr.f32.gmra.mrb[0].mxu0 %v487
      %v592 = vpop.f32.mrb[0].mxu0
      %v593 = vadd.f32 %v514, %v592
      %v594 = vpop.f32.mrb[0].mxu0
      %595 = vmatprep.mubr.f32.mxu0 0.0
      %596 = vmatmul.mubr.f32.gmra.mrb[0].mxu0 %v488
      %v597 = vpop.f32.mrb[0].mxu0
      %v598 = vadd.f32 %v514, %v597
      %v599 = vpop.f32.mrb[0].mxu0
      %600 = vmatprep.mubr.f32.mxu0 0.0
      %601 = vmatmul.mubr.f32.gmra.mrb[0].mxu0 %v489
      %v602 = vpop.f32.mrb[0].mxu0
      %v603 = vadd.f32 %v514, %v602
      %v604 = vpop.f32.mrb[0].mxu0
      %605 = vmatprep.mubr.f32.mxu0 0.0
      %606 = vmatmul.mubr.f32.gmra.mrb[0].mxu0 %v490
      %v607 = vpop.f32.mrb[0].mxu0
      %v608 = vadd.f32 %v514, %v607
      %v609 = vpop.f32.mrb[0].mxu0
      %610 = vmatprep.mubr.f32.mxu0 0.0
      %611 = vmatmul.mubr.f32.gmra.mrb[0].mxu0 %v491
      %v612 = vpop.f32.mrb[0].mxu0
      %v613 = vadd.f32 %v514, %v612
      %v614 = vpop.f32.mrb[0].mxu0
      %615 = vmatprep.mubr.f32.mxu0 0.0
      %616 = vmatmul.mubr.f32.gmra.mrb[0].mxu0 %v492
      %v617 = vpop.f32.mrb[0].mxu0
      %v618 = vadd.f32 %v514, %v617
      %v619 = vpop.f32.mrb[0].mxu0
      %620 = vdwg.mxu0
      %vm621 = vcmask 130048
      %622 = vst.msk [vmem:[#allocation2] sm:$0xff] %vm621, %v583
      %623 = vst.msk [vmem:[#allocation2 + $0x8] sm:$0xff] %vm621, %v588
      %624 = vst.msk [vmem:[#allocation2 + $0x10] sm:$0xff] %vm621, %v593
      %625 = vst.msk [vmem:[#allocation2 + $0x18] sm:$0xff] %vm621, %v598
      %626 = vst.msk [vmem:[#allocation2 + $0x20] sm:$0xff] %vm621, %v603
      %627 = vst.msk [vmem:[#allocation2 + $0x28] sm:$0xff] %vm621, %v608
      %628 = vst.msk [vmem:[#allocation2 + $0x30] sm:$0xff] %vm621, %v613
      %629 = vst.msk [vmem:[#allocation2 + $0x38] sm:$0xff] %vm621, %v618
      %v630 = vld [vmem:[#allocation2] ss:$8 sm:$0xf]
      %v631 = vld [vmem:[#allocation2] ss:$8 sm:$0xf0]
      %v632 = vor.u32 %v630, %v631
      %633 = vst.msk [vmem:[%s244] sm:$0xff] %vm621, %v632
      %s634 = scalar_lea.vmem [#allocation2], 1
      %v635 = vld [vmem:[%s634] ss:$8 sm:$0xf]
      %v636 = vld [vmem:[%s634] ss:$8 sm:$0xf0]
      %v637 = vor.u32 %v635, %v636
      %639 = vrot.lane.b32.xlu0 %v637, 16
      %v640 = vpop.permute.xlu0 %639
      %vm642 = vcmask 261248
      %643 = vst.msk [vmem:[%s244] sm:$0xff] %vm642, %v640
      %s644 = scalar_lea.vmem [#allocation2], 2
      %v645 = vld [vmem:[%s644] ss:$8 sm:$0xf]
      %v646 = vld [vmem:[%s644] ss:$8 sm:$0xf0]
      %v647 = vor.u32 %v645, %v646
      %649 = vrot.lane.b32.xlu0 %v647, 32
      %v650 = vpop.permute.xlu0 %649
      %vm652 = vcmask 392448
      %653 = vst.msk [vmem:[%s244] sm:$0xff] %vm652, %v650
      %s654 = scalar_lea.vmem [#allocation2], 3
      %v655 = vld [vmem:[%s654] ss:$8 sm:$0xf]
      %v656 = vld [vmem:[%s654] ss:$8 sm:$0xf0]
      %v657 = vor.u32 %v655, %v656
      %659 = vrot.lane.b32.xlu0 %v657, 48
      %v660 = vpop.permute.xlu0 %659
      %vm662 = vcmask 523648
      %663 = vst.msk [vmem:[%s244] sm:$0xff] %vm662, %v660
      %s664 = scalar_lea.vmem [#allocation2], 4
      %v665 = vld [vmem:[%s664] ss:$8 sm:$0xf]
      %v666 = vld [vmem:[%s664] ss:$8 sm:$0xf0]
      %v667 = vor.u32 %v665, %v666
      %669 = vrot.lane.b32.xlu0 %v667, 64
      %v670 = vpop.permute.xlu0 %669
      %vm672 = vcmask 654848
      %673 = vst.msk [vmem:[%s244] sm:$0xff] %vm672, %v670
      %s674 = scalar_lea.vmem [#allocation2], 5
      %v675 = vld [vmem:[%s674] ss:$8 sm:$0xf]
      %v676 = vld [vmem:[%s674] ss:$8 sm:$0xf0]
      %v677 = vor.u32 %v675, %v676
      %679 = vrot.lane.b32.xlu0 %v677, 80
      %v680 = vpop.permute.xlu0 %679
      %vm682 = vcmask 786048
      %683 = vst.msk [vmem:[%s244] sm:$0xff] %vm682, %v680
      %s684 = scalar_lea.vmem [#allocation2], 6
      %v685 = vld [vmem:[%s684] ss:$8 sm:$0xf]
      %v686 = vld [vmem:[%s684] ss:$8 sm:$0xf0]
      %v687 = vor.u32 %v685, %v686
      %689 = vrot.lane.b32.xlu0 %v687, 96
      %v690 = vpop.permute.xlu0 %689
      %vm692 = vcmask 917248
      %693 = vst.msk [vmem:[%s244] sm:$0xff] %vm692, %v690
      %s694 = scalar_lea.vmem [#allocation2], 7
      %v695 = vld [vmem:[%s694] ss:$8 sm:$0xf]
      %v696 = vld [vmem:[%s694] ss:$8 sm:$0xf0]
      %v697 = vor.u32 %v695, %v696
      %699 = vrot.lane.b32.xlu0 %v697, 112
      %v700 = vpop.permute.xlu0 %699
      %vm702 = vcmask 1048448
      %703 = vst.msk [vmem:[%s244] sm:$0xff] %vm702, %v700
      %p704 = scmp.lt.s32.totalorder %s16, 3
      %s705 = scalar_select %p704, %s16, 3
      %s706 = smul.addr %s705, 8
      %s707 = scalar_lea.vmem %s5, %s706
      // Predicated region
      $region41: #{user_embedding_forward.1} parent=39 // pred_check
        %p708 = pneg %p144
      $region42: #{user_embedding_forward.1} parent=39 // pred_check_branch
        %710 = sbr.rel (%p708) target = $region44
      $region43: #{user_embedding_forward.1} parent=39 // pred_region
        _
      $region44: #{user_embedding_forward.1} parent=39 // pred_fallthru
        _
    $region40: #{user_embedding_forward.1} parent=5 // pred_fallthru
      _
    %p711 = scmp.le.s32.totalorder 2, %s11
    // Predicated region
    $region45: #{user_embedding_forward.1} parent=5 // pred_check
      %p712 = pneg %p711
    $region46: #{user_embedding_forward.1} parent=5 // pred_check_branch
      %714 = sbr.rel (%p712) target = $region48
    $region47: #{user_embedding_forward.1} parent=5 // pred_region
      %s715 = ssub.s32 %s11, 2
      // Predicated region
      $region49: #{user_embedding_forward.1} parent=47 // pred_check
        %p716 = pneg %p150
      $region50: #{user_embedding_forward.1} parent=47 // pred_check_branch
        %718 = sbr.rel (%p716) target = $region52
      $region51: #{user_embedding_forward.1} parent=47 // pred_region
        %p719 = scmp.lt.s32.totalorder %s17, 3
        %s720 = scalar_select %p719, %s17, 3
        %s721 = smul.addr %s720, 8
        %s722 = scalar_lea.vmem %s5, %s721
      $region52: #{user_embedding_forward.1} parent=47 // pred_fallthru
        _
    $region48: #{user_embedding_forward.1} parent=5 // pred_fallthru
      _
  $region6: #{user_embedding_forward.1} parent=0 // loop_footer
    %s15 = sadd.s32 1, %s11
  $region7: #{user_embedding_forward.1} parent=0 // loop_footer_branch
    %10 = sbr.rel target = $region3
  $region8: #{user_embedding_forward.1} parent=0 // loop_exit
    _

</llo_original>
